<compile_context>
chip_gen: v6e
topology: v6e:2x2x1
jax: 0.10.0
libtpu: 0.0.40
codegen_flags: <defaults>
</compile_context>

<pallas_src>
from functools import partial

import jax
import jax.numpy as jnp
from jax import lax
from jax.experimental import pallas as pl
from jax.experimental.pallas import tpu as pltpu

N_LABEL = 25
N_CLASS = 3
LANE = 128
SUBLANE = 8
CHUNK_SUBLANES = 256          # in-kernel streaming slab (multiple of 16)


def _round_up(x, m):
    return (x + m - 1) // m * m


def _max_tile_sublanes():
    """Generation-dependent row-tile size (sublanes).  1024 is a safe default
    (63%->85% of HBM roofline vs 256 on v6e); v7x's faster HBM wants 2048."""
    try:
        info = pltpu.get_tpu_info()
        txt = " ".join(
            str(getattr(info, a, "")) for a in ("chip_version", "name", "version")
        )
        if "7" in txt:
            return 2048
    except Exception:
        pass
    return 1024


def _per_label_ce_kernel(p_ref, y_ref, w_ref, out_ref):
    # p_ref, y_ref: (3, TILE_S, 128) VMEM class planes (bf16 or f32)
    # w_ref:        (3,) f32 in SMEM
    # out_ref:      (1, 8, 128) f32 per-tile partial sum
    tile_s = p_ref.shape[1]                     # static
    w0 = w_ref[0]
    w1 = w_ref[1]
    w2 = w_ref[2]

    def slab_sum(start, size):
        # Weighted soft-target CE for `size` sublane rows, reduced on the VPU to
        # one (8, 128) vreg.  Padded rows have y == 0 and finite log-softmax, so
        # they contribute exactly 0.
        sl = pl.ds(start, size)
        p0 = p_ref[0, sl, :].astype(jnp.float32)
        p1 = p_ref[1, sl, :].astype(jnp.float32)
        p2 = p_ref[2, sl, :].astype(jnp.float32)
        y0 = y_ref[0, sl, :].astype(jnp.float32)
        y1 = y_ref[1, sl, :].astype(jnp.float32)
        y2 = y_ref[2, sl, :].astype(jnp.float32)

        # numerically-stable log-softmax across the 3 class planes
        # (VPU max/sub/add, EUP exp/log) — lane-dense, no cross-lane work.
        m = jnp.maximum(jnp.maximum(p0, p1), p2)
        z0 = p0 - m
        z1 = p1 - m
        z2 = p2 - m
        lse = jnp.log(jnp.exp(z0) + jnp.exp(z1) + jnp.exp(z2))

        wy0 = w0 * y0
        wy1 = w1 * y1
        wy2 = w2 * y2
        per_row = lse * (wy0 + wy1 + wy2) - (wy0 * z0 + wy1 * z1 + wy2 * z2)

        return jnp.sum(per_row.reshape(size // SUBLANE, SUBLANE, LANE), axis=0)

    n_full = tile_s // CHUNK_SUBLANES
    rem = tile_s - n_full * CHUNK_SUBLANES      # static, multiple of 8/16

    acc = jnp.zeros((SUBLANE, LANE), jnp.float32)
    if n_full > 0:                              # static Python branch
        def body(c, a):
            start = pl.multiple_of(c * CHUNK_SUBLANES, CHUNK_SUBLANES)
            return a + slab_sum(start, CHUNK_SUBLANES)
        acc = lax.fori_loop(0, n_full, body, acc, unroll=True)
    if rem > 0:                                 # static remainder slab
        acc = acc + slab_sum(n_full * CHUNK_SUBLANES, rem)

    out_ref[0] = acc


@partial(jax.jit, static_argnames=("n_label", "input_dtype"))
def per_label_cross_entropy_loss(p, y, weight, n_label=N_LABEL, *,
                                 input_dtype=jnp.bfloat16):
    """p, y: [B, n_label*3]; weight: [3]. Returns scalar f32 loss.

    `input_dtype` is the HBM staging dtype for p/y (math is always f32 in-kernel).
    """
    B, C = p.shape
    n_class = C // n_label
    assert C == n_label * n_class and n_class == N_CLASS
    R = B * n_label                             # true number of (batch,label) rows

    in_itemsize = jnp.dtype(input_dtype).itemsize
    sub_gran = (8 * 4) // in_itemsize           # min sublane tile: 8 (f32) / 16 (bf16)

    # Tile sizing: choose num_tiles first so padded reads are bounded to
    # < one sublane-group per tile (no full-tile padding waste).
    s_min = pl.cdiv(R, LANE)                    # sublanes actually needed
    max_tile = _max_tile_sublanes()
    num_tiles = pl.cdiv(s_min, max_tile)
    tile_s = _round_up(pl.cdiv(s_min, num_tiles), sub_gran)
    s_total = num_tiles * tile_s
    r_pad = s_total * LANE

    def planarize(x):
        # [B, n_label*n_class] -> [n_class, S, 128]   (row r = b*n_label + i)
        # cast -> transpose -> pad fuse into a single copy under jit; the cast
        # to bf16 halves both this pass and the kernel's HBM read.
        x = x.astype(input_dtype)
        x = x.reshape(B, n_label, n_class).transpose(2, 0, 1).reshape(n_class, R)
        x = jnp.pad(x, ((0, 0), (0, r_pad - R)))   # zero pad -> zero contribution
        return x.reshape(n_class, s_total, LANE)

    p_pl = planarize(p)
    y_pl = planarize(y)
    w = jnp.asarray(weight, dtype=jnp.float32).reshape(n_class)

    cost = pl.CostEstimate(
        flops=20 * r_pad,
        transcendentals=4 * r_pad,
        bytes_accessed=2 * n_class * r_pad * in_itemsize
        + num_tiles * SUBLANE * LANE * 4,
    )

    partials = pl.pallas_call(
        _per_label_ce_kernel,
        out_shape=jax.ShapeDtypeStruct((num_tiles, SUBLANE, LANE), jnp.float32),
        grid=(num_tiles,),
        in_specs=[
            pl.BlockSpec((n_class, tile_s, LANE), lambda i: (0, i, 0)),
            pl.BlockSpec((n_class, tile_s, LANE), lambda i: (0, i, 0)),
            pl.BlockSpec(memory_space=pltpu.MemorySpace.SMEM),
        ],
        out_specs=pl.BlockSpec((1, SUBLANE, LANE), lambda i: (i, 0, 0)),
        compiler_params=pltpu.CompilerParams(
            dimension_semantics=("parallel",),
            vmem_limit_bytes=32 * 1024 * 1024,   # portable incl. v7x (64 MiB phys)
        ),
        cost_estimate=cost,
    )(p_pl, y_pl, w)

    # tiny final reduction (num_tiles x 8 x 128) + mean over batch & labels
    return jnp.sum(partials) / jnp.float32(R)


def _reference_loss(p, y, weight, n_label=N_LABEL):
    # pure-JAX reference mirroring the PyTorch module (f32 throughout)
    loss = jnp.float32(0.0)
    w = jnp.asarray(weight, dtype=jnp.float32)
    for i in range(n_label):
        p_ = p[:, i * 3:(i + 1) * 3].astype(jnp.float32)
        y_ = y[:, i * 3:(i + 1) * 3].astype(jnp.float32)
        log_sm = jax.nn.log_softmax(p_, axis=-1)
        l_n = -jnp.sum(w[None, :] * y_ * log_sm, axis=-1)
        loss = loss + jnp.mean(l_n) / n_label
    return loss


if __name__ == "__main__":
    B = 2
    key = jax.random.PRNGKey(0)
    kp, ky = jax.random.split(key)

    # logits
    p = jax.random.normal(kp, (B, N_LABEL * N_CLASS), dtype=jnp.float32)
    # soft targets: valid per-label probability distributions
    y_logits = jax.random.normal(ky, (B, N_LABEL, N_CLASS), dtype=jnp.float32)
    y = jax.nn.softmax(y_logits, axis=-1).reshape(B, N_LABEL * N_CLASS)

    # deterministic module parameter (nn.CrossEntropyLoss weight default)
    weight = jnp.array([1.0, 1.0, 1.0], dtype=jnp.float32)

    ref = jax.block_until_ready(_reference_loss(p, y, weight))

    # exact-precision path (f32 staging): matches the PyTorch module tightly
    loss_f32 = jax.block_until_ready(
        per_label_cross_entropy_loss(p, y, weight, input_dtype=jnp.float32))
    assert jnp.allclose(loss_f32, ref, rtol=1e-5, atol=1e-5), (loss_f32, ref)

    # bandwidth-optimized default path (bf16 staging, f32 math in-kernel)
    loss_bf16 = jax.block_until_ready(per_label_cross_entropy_loss(p, y, weight))
    assert jnp.allclose(loss_bf16, ref, rtol=2e-2, atol=2e-2), (loss_bf16, ref)

    print("KERNEL_OK")
</pallas_src>

<mosaic_0001>
module attributes {stable_mosaic.version = 11 : i64} {
  func.func @_per_label_ce_kernel(%arg0: i32, %arg1: memref<3x8x128xf32, #tpu.memory_space<vmem>>, %arg2: memref<3x8x128xf32, #tpu.memory_space<vmem>>, %arg3: memref<3xf32, #tpu.memory_space<smem>>, %arg4: memref<1x8x128xf32, #tpu.memory_space<vmem>>) attributes {dimension_semantics = [#tpu.dimension_semantics<parallel>], iteration_bounds = array<i64: 1>, scalar_prefetch = 0 : i64, scratch_operands = 0 : i64, tpu.core_type = #tpu.core_type<tc>, window_params = [{transform_indices = @transform_0, window_bounds = array<i64: 3, 8, 128>}, {transform_indices = @transform_1, window_bounds = array<i64: 3, 8, 128>}, {transform_indices = @transform_2, window_bounds = array<i64: 3>}, {transform_indices = @transform_3, window_bounds = array<i64: 1, 8, 128>}]} {
    %c0 = arith.constant 0 : index
    %0 = memref.load %arg3[%c0] : memref<3xf32, #tpu.memory_space<smem>>
    %c1 = arith.constant 1 : index
    %1 = memref.load %arg3[%c1] : memref<3xf32, #tpu.memory_space<smem>>
    %c2 = arith.constant 2 : index
    %2 = memref.load %arg3[%c2] : memref<3xf32, #tpu.memory_space<smem>>
    %cst = arith.constant 0.000000e+00 : f32
    %3 = vector.broadcast %cst : f32 to vector<8x128xf32>
    %c0_0 = arith.constant 0 : index
    %c0_1 = arith.constant 0 : index
    %c0_2 = arith.constant 0 : index
    %4 = vector.load %arg1[%c0_0, %c0_1, %c0_2] : memref<3x8x128xf32, #tpu.memory_space<vmem>>, vector<1x8x128xf32>
    %5 = vector.shape_cast %4 : vector<1x8x128xf32> to vector<8x128xf32>
    %c1_3 = arith.constant 1 : index
    %c0_4 = arith.constant 0 : index
    %c0_5 = arith.constant 0 : index
    %6 = vector.load %arg1[%c1_3, %c0_4, %c0_5] : memref<3x8x128xf32, #tpu.memory_space<vmem>>, vector<1x8x128xf32>
    %7 = vector.shape_cast %6 : vector<1x8x128xf32> to vector<8x128xf32>
    %c2_6 = arith.constant 2 : index
    %c0_7 = arith.constant 0 : index
    %c0_8 = arith.constant 0 : index
    %8 = vector.load %arg1[%c2_6, %c0_7, %c0_8] : memref<3x8x128xf32, #tpu.memory_space<vmem>>, vector<1x8x128xf32>
    %9 = vector.shape_cast %8 : vector<1x8x128xf32> to vector<8x128xf32>
    %c0_9 = arith.constant 0 : index
    %c0_10 = arith.constant 0 : index
    %c0_11 = arith.constant 0 : index
    %10 = vector.load %arg2[%c0_9, %c0_10, %c0_11] : memref<3x8x128xf32, #tpu.memory_space<vmem>>, vector<1x8x128xf32>
    %11 = vector.shape_cast %10 : vector<1x8x128xf32> to vector<8x128xf32>
    %c1_12 = arith.constant 1 : index
    %c0_13 = arith.constant 0 : index
    %c0_14 = arith.constant 0 : index
    %12 = vector.load %arg2[%c1_12, %c0_13, %c0_14] : memref<3x8x128xf32, #tpu.memory_space<vmem>>, vector<1x8x128xf32>
    %13 = vector.shape_cast %12 : vector<1x8x128xf32> to vector<8x128xf32>
    %c2_15 = arith.constant 2 : index
    %c0_16 = arith.constant 0 : index
    %c0_17 = arith.constant 0 : index
    %14 = vector.load %arg2[%c2_15, %c0_16, %c0_17] : memref<3x8x128xf32, #tpu.memory_space<vmem>>, vector<1x8x128xf32>
    %15 = vector.shape_cast %14 : vector<1x8x128xf32> to vector<8x128xf32>
    %16 = arith.maximumf %5, %7 : vector<8x128xf32>
    %17 = arith.maximumf %16, %9 : vector<8x128xf32>
    %18 = arith.subf %5, %17 : vector<8x128xf32>
    %19 = arith.subf %7, %17 : vector<8x128xf32>
    %20 = arith.subf %9, %17 : vector<8x128xf32>
    %21 = math.exp %18 : vector<8x128xf32>
    %22 = math.exp %19 : vector<8x128xf32>
    %23 = arith.addf %21, %22 : vector<8x128xf32>
    %24 = math.exp %20 : vector<8x128xf32>
    %25 = arith.addf %23, %24 : vector<8x128xf32>
    %26 = math.log %25 : vector<8x128xf32>
    %27 = vector.broadcast %0 : f32 to vector<8x128xf32>
    %28 = arith.mulf %27, %11 : vector<8x128xf32>
    %29 = vector.broadcast %1 : f32 to vector<8x128xf32>
    %30 = arith.mulf %29, %13 : vector<8x128xf32>
    %31 = vector.broadcast %2 : f32 to vector<8x128xf32>
    %32 = arith.mulf %31, %15 : vector<8x128xf32>
    %33 = arith.addf %28, %30 : vector<8x128xf32>
    %34 = arith.addf %33, %32 : vector<8x128xf32>
    %35 = arith.mulf %26, %34 : vector<8x128xf32>
    %36 = arith.mulf %28, %18 : vector<8x128xf32>
    %37 = arith.mulf %30, %19 : vector<8x128xf32>
    %38 = arith.addf %36, %37 : vector<8x128xf32>
    %39 = arith.mulf %32, %20 : vector<8x128xf32>
    %40 = arith.addf %38, %39 : vector<8x128xf32>
    %41 = arith.subf %35, %40 : vector<8x128xf32>
    %42 = vector.shape_cast %41 : vector<8x128xf32> to vector<1x8x128xf32>
    %cst_18 = arith.constant dense<0.000000e+00> : vector<8x128xf32>
    %43 = vector.multi_reduction <add>, %42, %cst_18 [0] : vector<1x8x128xf32> to vector<8x128xf32>
    %44 = arith.addf %3, %43 : vector<8x128xf32>
    %c0_19 = arith.constant 0 : index
    %c0_20 = arith.constant 0 : index
    %c0_21 = arith.constant 0 : index
    %45 = vector.load %arg4[%c0_19, %c0_20, %c0_21] : memref<1x8x128xf32, #tpu.memory_space<vmem>>, vector<1x8x128xf32>
    %46 = vector.shape_cast %45 : vector<1x8x128xf32> to vector<8x128xf32>
    %47 = vector.shape_cast %44 : vector<8x128xf32> to vector<1x8x128xf32>
    tpu.vector_store %arg4[%c0_19, %c0_20, %c0_21], %47 {strides = array<i32>} : memref<1x8x128xf32, #tpu.memory_space<vmem>>, vector<1x8x128xf32>,
    return
  }
  func.func @transform_0(%arg0: i32) -> (i32, i32, i32) {
    %c0_i32 = arith.constant 0 : i32
    %c0_i32_0 = arith.constant 0 : i32
    %c0_i32_1 = arith.constant 0 : i32
    return %c0_i32, %arg0, %c0_i32_0 : i32, i32, i32
  }
  func.func @transform_1(%arg0: i32) -> (i32, i32, i32) {
    %c0_i32 = arith.constant 0 : i32
    %c0_i32_0 = arith.constant 0 : i32
    %c0_i32_1 = arith.constant 0 : i32
    return %c0_i32, %arg0, %c0_i32_0 : i32, i32, i32
  }
  func.func @transform_2(%arg0: i32) -> i32 {
    %c0_i32 = arith.constant 0 : i32
    %c0_i32_0 = arith.constant 0 : i32
    return %c0_i32 : i32
  }
  func.func @transform_3(%arg0: i32) -> (i32, i32, i32) {
    %c0_i32 = arith.constant 0 : i32
    %c0_i32_0 = arith.constant 0 : i32
    %c0_i32_1 = arith.constant 0 : i32
    return %arg0, %c0_i32, %c0_i32_0 : i32, i32, i32
  }
}

</mosaic_0001>

<llo_original>
// kernel: per_label_cross_entropy_loss.1
$region0: #{per_label_cross_entropy_loss.1}
  #allocation0 [shape = 'u32[]', space=smem, size = 0x4, offset = 0x4, fixed_abs, tag = 'smem constant byte address 0x4 - core index']
  #allocation1 [shape = 'u32[144,128]{1,0:T(1,128)}', space=vmem, size = 0x12000, scoped, tag = 'internal scratch']
  %s0 = inlined_call_operand.vmem [shape: f32[3,8,128], index: 0, kind: input, shape index: {}]
  %s1 = inlined_call_operand.vmem [shape: f32[3,8,128], index: 1, kind: input, shape index: {}]
  %s2 = inlined_call_operand.vmem [shape: f32[3], index: 2, kind: input, shape index: {}]
  %s3 = inlined_call_operand.vmem [shape: f32[1,8,128], index: 3, kind: output, shape index: {}]
  %s4 = sld [smem:[#allocation0]]
  $region26: #{per_label_cross_entropy_loss.1} parent=0
    _
  %s6 = ssub.s32 1, %s4
  %s7 = scalar_select 0, %s6, %s4
  $region1: #{per_label_cross_entropy_loss.1} parent=0
    #allocation2 [shape = 'u8[512]{0}', space=smem, size = 0x200, scoped, tag = 'input window, operand 2, single buffered']
    #allocation3 [shape = 's32[1]{0}', space=sflag, size = 0x4, scoped, tag = 'scoped memory for per_label_cross_entropy_loss.1']
    %8 = vsyncpa [#allocation3], 0
    // Predicated region
    $region2: #{per_label_cross_entropy_loss.1} parent=1 // pred_check
      _
    $region3: #{per_label_cross_entropy_loss.1} parent=1 // pred_check_branch
      %10 = sbr.rel (0) target = $region5
    $region4: #{per_label_cross_entropy_loss.1} parent=1 // pred_region
      _
    $region5: #{per_label_cross_entropy_loss.1} parent=1 // pred_fallthru
      _
    // Predicated region
    $region6: #{per_label_cross_entropy_loss.1} parent=1 // pred_check
      _
    $region7: #{per_label_cross_entropy_loss.1} parent=1 // pred_check_branch
      %12 = sbr.rel (0) target = $region9
    $region8: #{per_label_cross_entropy_loss.1} parent=1 // pred_region
      _
    $region9: #{per_label_cross_entropy_loss.1} parent=1 // pred_fallthru
      _
    // Predicated region
    $region10: #{per_label_cross_entropy_loss.1} parent=1 // pred_check
      _
    $region11: #{per_label_cross_entropy_loss.1} parent=1 // pred_check_branch
      %14 = sbr.rel (0) target = $region13
    $region12: #{per_label_cross_entropy_loss.1} parent=1 // pred_region
      %s16 = ssub.s32 16, 16
      %17 = vsyncadd [#allocation3], %s16
      %s19 = sshll.u32 %s2, 4
      %s20 = int_to_ptr.vmem [resolvable:$true] %s19
      %22 = dma.vmem_to_smem %s20, 16, [#allocation2], [#allocation3]
    $region13: #{per_label_cross_entropy_loss.1} parent=1 // pred_fallthru
      _
    // Predicated region
    $region14: #{per_label_cross_entropy_loss.1} parent=1 // pred_check
      _
    $region15: #{per_label_cross_entropy_loss.1} parent=1 // pred_check_branch
      %24 = sbr.rel (0) target = $region17
    $region16: #{per_label_cross_entropy_loss.1} parent=1 // pred_region
      %25 = dma.done [#allocation3], 16
    $region17: #{per_label_cross_entropy_loss.1} parent=1 // pred_fallthru
      _
    %26 = sfence
    %s27 = sld [smem:[#allocation2]]
    %s28 = sld [smem:[#allocation2 + $0x1]]
    %s29 = sld [smem:[#allocation2 + $0x2]]
    %v30 = vld [vmem:[%s0] sm:$0xff]
    %s31 = scalar_lea.vmem %s0, 8
    %v32 = vld [vmem:[%s31] sm:$0xff]
    %s33 = scalar_lea.vmem %s0, 16
    %v34 = vld [vmem:[%s33] sm:$0xff]
    %v35 = vld [vmem:[%s1] sm:$0xff]
    %s36 = scalar_lea.vmem %s1, 8
    %v37 = vld [vmem:[%s36] sm:$0xff]
    %s38 = scalar_lea.vmem %s1, 16
    %v39 = vld [vmem:[%s38] sm:$0xff]
    %v40 = vmax.f32 %v30, %v32
    %v41 = vmax.f32 %v40, %v34
    %v42 = vsub.f32 %v30, %v41
    %v43 = vsub.f32 %v32, %v41
    %v44 = vsub.f32 %v34, %v41
    %v45 = vmul.f32 %v42, 1.442695
    %v46 = vpow.pop %v45
    %v47 = vmul.f32 %v43, 1.442695
    %v48 = vpow.pop %v47
    %v49 = vadd.f32 %v46, %v48
    %v50 = vmul.f32 %v44, 1.442695
    %v51 = vpow.pop %v50
    %v52 = vadd.f32 %v49, %v51
    %v53 = vlog2.pop %v52
    %v54 = vmul.f32 %v53, 0.6931472
    %v55 = vstv %s27
    %v56 = vmul.f32 %v55, %v35
    %v57 = vstv %s28
    %v58 = vmul.f32 %v57, %v37
    %v59 = vstv %s29
    %v60 = vmul.f32 %v59, %v39
    %v61 = vadd.f32 %v56, %v58
    %v62 = vadd.f32 %v61, %v60
    %v63 = vmul.f32 %v54, %v62
    %v64 = vmul.f32 %v56, %v42
    %v65 = vmul.f32 %v58, %v43
    %v66 = vadd.f32 %v64, %v65
    %v67 = vmul.f32 %v60, %v44
    %v68 = vadd.f32 %v66, %v67
    %v69 = vsub.f32 %v63, %v68
    %v70 = vadd.f32 %v69, 0.0
    %v71 = vadd.f32 %v70, 0.0
    %72 = vst [vmem:[%s3] sm:$0xff] %v71
    // Predicated region
    $region18: #{per_label_cross_entropy_loss.1} parent=1 // pred_check
      _
    $region19: #{per_label_cross_entropy_loss.1} parent=1 // pred_check_branch
      %74 = sbr.rel (0) target = $region21
    $region20: #{per_label_cross_entropy_loss.1} parent=1 // pred_region
      _
    $region21: #{per_label_cross_entropy_loss.1} parent=1 // pred_fallthru
      _
    // Predicated region
    $region22: #{per_label_cross_entropy_loss.1} parent=1 // pred_check
      _
    $region23: #{per_label_cross_entropy_loss.1} parent=1 // pred_check_branch
      %76 = sbr.rel (0) target = $region25
    $region24: #{per_label_cross_entropy_loss.1} parent=1 // pred_region
      _
    $region25: #{per_label_cross_entropy_loss.1} parent=1 // pred_fallthru
      _
    %77 = vsyncpa [#allocation3], 1

</llo_original>
